<compile_context>
chip_gen: v7x
topology: tpu7x:2x2x1
jax: 0.10.0
libtpu: 0.0.40
codegen_flags: <defaults>
</compile_context>

<pallas_src>
import functools
import math

import jax
import jax.numpy as jnp
from jax.experimental import pallas as pl
from jax.experimental.pallas import tpu as pltpu


def _round_up(v, m):
    return (v + m - 1) // m * m


# ----------------------------- Pallas kernels -----------------------------

def _matmul_kernel(x_ref, w_ref, b_ref, o_ref, acc_ref, *, activation):
    """Tiled matmul: bf16 MXU inputs, f32 VMEM accumulator, bias (+ReLU) fused on last k."""
    k = pl.program_id(2)

    @pl.when(k == 0)
    def _():
        acc_ref[...] = jnp.zeros_like(acc_ref)

    acc_ref[...] += jnp.dot(
        x_ref[...].astype(jnp.bfloat16),
        w_ref[...].astype(jnp.bfloat16),
        preferred_element_type=jnp.float32)

    @pl.when(k == pl.num_programs(2) - 1)
    def _():
        y = acc_ref[...] + b_ref[...].astype(jnp.float32)
        if activation == "relu":
            y = jnp.maximum(y, 0.0)
        o_ref[...] = y.astype(o_ref.dtype)


def linear(x, w, b, activation=None, *, tm_cap=256, tn_cap=256, tk_cap=512):
    """x: (M, K) @ w: (K, N) + b, tiled/pipelined over (M, N, K)."""
    M, K = x.shape
    N = w.shape[1]
    tm = min(_round_up(M, 8), tm_cap)
    tn = min(_round_up(N, 128), tn_cap)
    tk = min(_round_up(K, 128), tk_cap)
    Mp, Kp, Np = _round_up(M, tm), _round_up(K, tk), _round_up(N, tn)
    xp = x if (Mp == M and Kp == K) else jnp.pad(x, ((0, Mp - M), (0, Kp - K)))
    wp = w if (Kp == K and Np == N) else jnp.pad(w, ((0, Kp - K), (0, Np - N)))
    bp = (b if Np == N else jnp.pad(b, (0, Np - N))).reshape(1, Np)

    out = pl.pallas_call(
        functools.partial(_matmul_kernel, activation=activation),
        out_shape=jax.ShapeDtypeStruct((Mp, Np), jnp.float32),
        grid=(Mp // tm, Np // tn, Kp // tk),
        in_specs=[
            pl.BlockSpec((tm, tk), lambda i, j, k: (i, k)),
            pl.BlockSpec((tk, tn), lambda i, j, k: (k, j)),
            pl.BlockSpec((1, tn), lambda i, j, k: (0, j)),
        ],
        out_specs=pl.BlockSpec((tm, tn), lambda i, j, k: (i, j)),
        scratch_shapes=[pltpu.VMEM((tm, tn), jnp.float32)],
        compiler_params=pltpu.CompilerParams(
            dimension_semantics=("parallel", "parallel", "arbitrary")),
    )(xp, wp, bp)
    if Mp != M or Np != N:
        out = out[:M, :N]
    return out


def _ln(x, g, b, eps):
    mean = jnp.mean(x, axis=-1, keepdims=True)
    var = jnp.mean(jnp.square(x - mean), axis=-1, keepdims=True)
    return (x - mean) * jax.lax.rsqrt(var + eps) * g + b


def _row_call(kernel, row_inputs, full_inputs, M, out_n, *, tm_cap=512):
    """Run `kernel` tiled over rows of `row_inputs`; `full_inputs` stay whole in VMEM."""
    tm = min(_round_up(M, 8), tm_cap)
    Mp = _round_up(M, tm)
    padded_rows, in_specs = [], []
    for a in row_inputs:
        padded_rows.append(a if Mp == M else jnp.pad(a, ((0, Mp - M), (0, 0))))
        in_specs.append(pl.BlockSpec((tm, a.shape[1]), lambda i: (i, 0)))
    for a in full_inputs:
        in_specs.append(pl.BlockSpec(a.shape, lambda i: (0, 0)))
    out = pl.pallas_call(
        kernel,
        out_shape=jax.ShapeDtypeStruct((Mp, out_n), jnp.float32),
        grid=(Mp // tm,),
        in_specs=in_specs,
        out_specs=pl.BlockSpec((tm, out_n), lambda i: (i, 0)),
        compiler_params=pltpu.CompilerParams(dimension_semantics=("parallel",)),
    )(*padded_rows, *full_inputs)
    return out[:M] if Mp != M else out


def _layernorm_kernel(x_ref, g_ref, b_ref, o_ref, *, eps):
    x = x_ref[...].astype(jnp.float32)
    o_ref[...] = _ln(x, g_ref[...].astype(jnp.float32),
                     b_ref[...].astype(jnp.float32), eps).astype(o_ref.dtype)


def layernorm(x, g, b, eps=1e-5):
    M, D = x.shape
    return _row_call(functools.partial(_layernorm_kernel, eps=eps),
                     [x], [g.reshape(1, D), b.reshape(1, D)], M, D)


def _proj_add_ln_kernel(x_ref, r_ref, w_ref, bp_ref, g_ref, bb_ref, o_ref, *, eps):
    """out = LayerNorm(residual + (x @ w + b)) — attention output projection branch."""
    y = jnp.dot(x_ref[...].astype(jnp.bfloat16), w_ref[...].astype(jnp.bfloat16),
                preferred_element_type=jnp.float32)
    y = y + bp_ref[...].astype(jnp.float32) + r_ref[...].astype(jnp.float32)
    o_ref[...] = _ln(y, g_ref[...].astype(jnp.float32),
                     bb_ref[...].astype(jnp.float32), eps).astype(o_ref.dtype)


def proj_add_layernorm(x, res, w, b, g, beta, eps=1e-5):
    M, _ = x.shape
    N = w.shape[1]
    return _row_call(functools.partial(_proj_add_ln_kernel, eps=eps),
                     [x, res],
                     [w, b.reshape(1, N), g.reshape(1, N), beta.reshape(1, N)],
                     M, N, tm_cap=256)


def _ffn_add_ln_kernel(x_ref, w1_ref, b1_ref, w2_ref, b2_ref, g_ref, bb_ref, o_ref, *, eps):
    """out = LayerNorm(x + Lin2(ReLU(Lin1(x)))) — fused FFN branch (post-norm)."""
    x = x_ref[...].astype(jnp.float32)
    h = jnp.dot(x.astype(jnp.bfloat16), w1_ref[...].astype(jnp.bfloat16),
                preferred_element_type=jnp.float32) + b1_ref[...].astype(jnp.float32)
    h = jnp.maximum(h, 0.0)
    f = jnp.dot(h.astype(jnp.bfloat16), w2_ref[...].astype(jnp.bfloat16),
                preferred_element_type=jnp.float32) + b2_ref[...].astype(jnp.float32)
    y = x + f
    o_ref[...] = _ln(y, g_ref[...].astype(jnp.float32),
                     bb_ref[...].astype(jnp.float32), eps).astype(o_ref.dtype)


def ffn_add_layernorm(x, w1, b1, w2, b2, g, beta, eps=1e-5):
    M, D = x.shape
    H = w1.shape[1]
    return _row_call(functools.partial(_ffn_add_ln_kernel, eps=eps),
                     [x], [w1, b1.reshape(1, H), w2, b2.reshape(1, D),
                           g.reshape(1, D), beta.reshape(1, D)],
                     M, D, tm_cap=256)


def _mlp_kernel(x_ref, w1_ref, b1_ref, w2_ref, b2_ref, o_ref):
    """Fused Linear -> ReLU -> Linear (MAE decoder)."""
    h = jnp.dot(x_ref[...].astype(jnp.bfloat16), w1_ref[...].astype(jnp.bfloat16),
                preferred_element_type=jnp.float32) + b1_ref[...].astype(jnp.float32)
    h = jnp.maximum(h, 0.0)
    o_ref[...] = (jnp.dot(h.astype(jnp.bfloat16), w2_ref[...].astype(jnp.bfloat16),
                          preferred_element_type=jnp.float32)
                  + b2_ref[...].astype(jnp.float32)).astype(o_ref.dtype)


def mlp(x, w1, b1, w2, b2):
    M, _ = x.shape
    H = w1.shape[1]
    N = w2.shape[1]
    return _row_call(_mlp_kernel, [x],
                     [w1, b1.reshape(1, H), w2, b2.reshape(1, N)], M, N, tm_cap=256)


def _attn_kernel(qkv_ref, o_ref, *, n_heads, scale):
    """Per-batch attention over the fused QKV tile.

    qkv columns are ordered [q | k | v], heads contiguous inside each block, which matches
    PyTorch nn.MultiheadAttention's in_proj layout — so the head split/merge is pure in-VMEM
    lane slicing (no HBM transposes), and the merged output store is a single lane-dense write.
    """
    qkv = qkv_ref[...]                                    # (S, 3*D), batch dim squeezed
    D = qkv.shape[-1] // 3
    hd = D // n_heads
    heads = []
    for h in range(n_heads):                              # static unroll over heads
        q = qkv[:, h * hd:(h + 1) * hd].astype(jnp.float32) * scale
        k = qkv[:, D + h * hd:D + (h + 1) * hd]
        v = qkv[:, 2 * D + h * hd:2 * D + (h + 1) * hd]
        s = jnp.dot(q.astype(jnp.bfloat16), k.astype(jnp.bfloat16).T,
                    preferred_element_type=jnp.float32)
        s = s - jnp.max(s, axis=-1, keepdims=True)        # softmax stats stay f32
        p = jnp.exp(s)
        inv = pl.reciprocal(jnp.sum(p, axis=-1, keepdims=True), approx=True)
        o = jnp.dot(p.astype(jnp.bfloat16), v.astype(jnp.bfloat16),
                    preferred_element_type=jnp.float32) * inv
        heads.append(o)
    o_ref[...] = jnp.concatenate(heads, axis=-1).astype(o_ref.dtype)


def mha_attention(qkv, n_heads, scale):
    """qkv: (B, S, 3*D) -> (B, S, D) multi-head self-attention."""
    B, S, D3 = qkv.shape
    D = D3 // 3
    # TODO(synk): at very long visible-sequence lengths, stream KV tiles (flash-style
    # online softmax) instead of one (S, S) score block per head.
    return pl.pallas_call(
        functools.partial(_attn_kernel, n_heads=n_heads, scale=scale),
        out_shape=jax.ShapeDtypeStruct((B, S, D), jnp.float32),
        grid=(B,),
        in_specs=[pl.BlockSpec((None, S, D3), lambda b: (b, 0, 0))],
        out_specs=pl.BlockSpec((None, S, D), lambda b: (b, 0, 0)),
        compiler_params=pltpu.CompilerParams(dimension_semantics=("parallel",)),
    )(qkv)


# ----------------------------- model glue -----------------------------

def init_params(key, *, in_channels, patch_size, emb_dim, depth, n_heads,
                mlp_dim, dec_hidden, dec_out, seq_len):
    ks = jax.random.split(key, 8 + depth)

    def w(k, shape):
        return jax.random.normal(k, shape, jnp.float32) * 0.02

    p3 = in_channels * patch_size ** 3
    params = {
        "proj_w": w(ks[0], (p3, emb_dim)),                 # Conv3d(kernel=stride=p) as matmul
        "proj_b": jnp.zeros((emb_dim,), jnp.float32),
        "cls_token": jnp.zeros((1, 1, emb_dim), jnp.float32),
        "pos_embed": w(ks[1], (1, seq_len, emb_dim)),      # trunc_normal(std=0.02) ~ normal*0.02
        "norm_g": jnp.ones((emb_dim,), jnp.float32),
        "norm_b": jnp.zeros((emb_dim,), jnp.float32),
        "dec_w1": w(ks[2], (emb_dim, dec_hidden)),
        "dec_b1": jnp.zeros((dec_hidden,), jnp.float32),
        "dec_w2": w(ks[3], (dec_hidden, dec_out)),
        "dec_b2": jnp.zeros((dec_out,), jnp.float32),
        "layers": [],
    }
    for d in range(depth):
        lk = jax.random.split(ks[8 + d], 4)
        params["layers"].append({
            "in_w": w(lk[0], (emb_dim, 3 * emb_dim)),      # columns ordered [q|k|v], heads contiguous
            "in_b": jnp.zeros((3 * emb_dim,), jnp.float32),
            "out_w": w(lk[1], (emb_dim, emb_dim)),
            "out_b": jnp.zeros((emb_dim,), jnp.float32),
            "ln1_g": jnp.ones((emb_dim,), jnp.float32),
            "ln1_b": jnp.zeros((emb_dim,), jnp.float32),
            "ff_w1": w(lk[2], (emb_dim, mlp_dim)),
            "ff_b1": jnp.zeros((mlp_dim,), jnp.float32),
            "ff_w2": w(lk[3], (mlp_dim, emb_dim)),
            "ff_b2": jnp.zeros((emb_dim,), jnp.float32),
            "ln2_g": jnp.ones((emb_dim,), jnp.float32),
            "ln2_b": jnp.zeros((emb_dim,), jnp.float32),
        })
    return params


def encoder_layer(x, lp, n_heads):
    """PyTorch TransformerEncoderLayer, batch_first, post-norm, ReLU FFN."""
    # TODO(synk): dropout(p=0.1) is treated as identity (eval-mode semantics).
    B, S, D = x.shape
    hd = D // n_heads
    xf = x.reshape(B * S, D)

    qkv = linear(xf, lp["in_w"], lp["in_b"])                       # (B*S, 3D), tiled matmul
    ctx = mha_attention(qkv.reshape(B, S, 3 * D), n_heads,
                        scale=1.0 / math.sqrt(hd))                 # (B, S, D), no HBM transposes
    h = proj_add_layernorm(ctx.reshape(B * S, D), xf,
                           lp["out_w"], lp["out_b"], lp["ln1_g"], lp["ln1_b"])
    h = ffn_add_layernorm(h, lp["ff_w1"], lp["ff_b1"], lp["ff_w2"], lp["ff_b2"],
                          lp["ln2_g"], lp["ln2_b"])
    return h.reshape(B, S, D)


def vit_mae_forward(params, x, mask_key, *, patch_size, emb_dim, n_heads,
                    dec_out, mask_ratio=0.75):
    B, C, D1, D2, D3 = x.shape
    p = patch_size
    gd, gh, gw = D1 // p, D2 // p, D3 // p
    N = gd * gh * gw

    # --- PatchEmbed3D: non-overlapping patches + linear projection (tiled Pallas matmul) ---
    patches = x.reshape(B, C, gd, p, gh, p, gw, p)
    patches = patches.transpose(0, 2, 4, 6, 1, 3, 5, 7).reshape(B, N, C * p * p * p)
    emb = linear(patches.reshape(B * N, -1), params["proj_w"], params["proj_b"])
    emb = emb.reshape(B, N, emb_dim)

    # --- random masking (plain JAX: index shuffle / gather) ---
    num_mask = int(N * mask_ratio)
    rand = jax.random.uniform(mask_key, (B, N))
    rand_idx = jnp.argsort(rand, axis=1)
    keep_idx = rand_idx[:, : N - num_mask]
    mask_idx = rand_idx[:, N - num_mask:]
    batch_range = jnp.arange(B)[:, None]
    visible = emb[batch_range, keep_idx]                           # (B, keep, D)

    # --- ViT encoder ---
    S = visible.shape[1] + 1
    cls = jnp.broadcast_to(params["cls_token"], (B, 1, emb_dim))
    h = jnp.concatenate([cls, visible], axis=1)                    # (B, S, D)
    h = h + params["pos_embed"]
    for lp in params["layers"]:
        h = encoder_layer(h, lp, n_heads)
    h = layernorm(h.reshape(B * S, emb_dim), params["norm_g"], params["norm_b"])
    h = h.reshape(B, S, emb_dim)

    cls_out = h[:, 0]
    enc_patches = h[:, 1:]

    # scatter visible tokens back into a zero canvas (plain JAX)
    full = jnp.zeros((B, N, emb_dim), jnp.float32).at[batch_range, keep_idx].set(enc_patches)

    # --- MAE decoder: fused Linear -> ReLU -> Linear (one Pallas kernel) ---
    pred = mlp(full.reshape(B * N, emb_dim),
               params["dec_w1"], params["dec_b1"],
               params["dec_w2"], params["dec_b2"]).reshape(B, N, dec_out)
    return pred, mask_idx, cls_out


# ----------------------------- main -----------------------------

if __name__ == "__main__":
    # small-shape config consistent with the module's structure
    B, C = 2, 1
    patch_size = 4
    volume = (8, 8, 8)
    emb_dim, depth, n_heads, mlp_dim = 32, 2, 4, 64
    dec_hidden = 32
    dec_out = patch_size ** 3          # MAEDecoder patch_dim (scaled with patch_size)
    mask_ratio = 0.75

    gd, gh, gw = (v // patch_size for v in volume)
    N = gd * gh * gw                   # 8 tokens
    num_mask = int(N * mask_ratio)     # 6 masked, 2 kept
    seq_len = (N - num_mask) + 1       # +cls

    key = jax.random.PRNGKey(0)
    k_x, k_mask, k_params = jax.random.split(key, 3)
    x = jax.random.normal(k_x, (B, C) + volume, dtype=jnp.float32)

    params = init_params(
        k_params, in_channels=C, patch_size=patch_size, emb_dim=emb_dim,
        depth=depth, n_heads=n_heads, mlp_dim=mlp_dim,
        dec_hidden=dec_hidden, dec_out=dec_out, seq_len=seq_len)

    pred, mask_idx, cls_tok = vit_mae_forward(
        params, x, k_mask, patch_size=patch_size, emb_dim=emb_dim,
        n_heads=n_heads, dec_out=dec_out, mask_ratio=mask_ratio)

    jax.block_until_ready((pred, mask_idx, cls_tok))
    assert pred.shape == (B, N, dec_out)
    assert mask_idx.shape == (B, num_mask)
    assert cls_tok.shape == (B, emb_dim)
    assert bool(jnp.all(jnp.isfinite(pred)))
    print("KERNEL_OK")
</pallas_src>

<mosaic_0001>
module attributes {stable_mosaic.version = 11 : i64} {
  func.func @_matmul_kernel(%arg0: i32, %arg1: i32, %arg2: i32, %arg3: memref<16x128xf32, #tpu.memory_space<vmem>>, %arg4: memref<128x128xf32, #tpu.memory_space<vmem>>, %arg5: memref<1x128xf32, #tpu.memory_space<vmem>>, %arg6: memref<16x128xf32, #tpu.memory_space<vmem>>, %arg7: memref<16x128xf32, #tpu.memory_space<vmem>>) attributes {dimension_semantics = [#tpu.dimension_semantics<parallel>, #tpu.dimension_semantics<parallel>, #tpu.dimension_semantics<arbitrary>], iteration_bounds = array<i64: 1, 1, 1>, scalar_prefetch = 0 : i64, scratch_operands = 1 : i64, tpu.core_type = #tpu.core_type<tc>, window_params = [{transform_indices = @transform_0, window_bounds = array<i64: 16, 128>}, {transform_indices = @transform_1, window_bounds = array<i64: 128, 128>}, {transform_indices = @transform_2, window_bounds = array<i64: 1, 128>}, {transform_indices = @transform_3, window_bounds = array<i64: 16, 128>}]} {
    %c0_i32 = arith.constant 0 : i32
    %0 = arith.cmpi eq, %arg2, %c0_i32 : i32
    %1 = arith.extui %0 : i1 to i32
    %c0_i32_0 = arith.constant 0 : i32
    %2 = arith.cmpi ne, %1, %c0_i32_0 : i32
    scf.if %2 {
      %cst_10 = arith.constant 0.000000e+00 : f32
      %14 = vector.broadcast %cst_10 : f32 to vector<16x128xf32>
      %c0_11 = arith.constant 0 : index
      %c0_12 = arith.constant 0 : index
      %15 = vector.load %arg7[%c0_11, %c0_12] : memref<16x128xf32, #tpu.memory_space<vmem>>, vector<16x128xf32>
      tpu.vector_store %arg7[%c0_11, %c0_12], %14 {strides = array<i32>} : memref<16x128xf32, #tpu.memory_space<vmem>>, vector<16x128xf32>,
    } else {
    }
    %c0 = arith.constant 0 : index
    %c0_1 = arith.constant 0 : index
    %3 = vector.load %arg7[%c0, %c0_1] : memref<16x128xf32, #tpu.memory_space<vmem>>, vector<16x128xf32>
    %c0_2 = arith.constant 0 : index
    %c0_3 = arith.constant 0 : index
    %4 = vector.load %arg3[%c0_2, %c0_3] : memref<16x128xf32, #tpu.memory_space<vmem>>, vector<16x128xf32>
    %5 = arith.truncf %4 : vector<16x128xf32> to vector<16x128xbf16>
    %c0_4 = arith.constant 0 : index
    %c0_5 = arith.constant 0 : index
    %6 = vector.load %arg4[%c0_4, %c0_5] : memref<128x128xf32, #tpu.memory_space<vmem>>, vector<128x128xf32>
    %7 = arith.truncf %6 : vector<128x128xf32> to vector<128x128xbf16>
    %cst = arith.constant dense<0.000000e+00> : vector<16x128xf32>
    %8 = tpu.matmul %5, %7, %cst {dimension_numbers = #tpu.dot_dimension_numbers<[1], [0], [0], [1], [0, 0, 1, 1], [], []>} : vector<16x128xbf16>, vector<128x128xbf16>, vector<16x128xf32> -> vector<16x128xf32>
    %9 = arith.addf %3, %8 : vector<16x128xf32>
    %c0_6 = arith.constant 0 : index
    %c0_7 = arith.constant 0 : index
    %10 = vector.load %arg7[%c0_6, %c0_7] : memref<16x128xf32, #tpu.memory_space<vmem>>, vector<16x128xf32>
    tpu.vector_store %arg7[%c0_6, %c0_7], %9 {strides = array<i32>} : memref<16x128xf32, #tpu.memory_space<vmem>>, vector<16x128xf32>,
    %c0_i32_8 = arith.constant 0 : i32
    %11 = arith.cmpi eq, %arg2, %c0_i32_8 : i32
    %12 = arith.extui %11 : i1 to i32
    %c0_i32_9 = arith.constant 0 : i32
    %13 = arith.cmpi ne, %12, %c0_i32_9 : i32
    scf.if %13 {
      %c0_10 = arith.constant 0 : index
      %c0_11 = arith.constant 0 : index
      %14 = vector.load %arg7[%c0_10, %c0_11] : memref<16x128xf32, #tpu.memory_space<vmem>>, vector<16x128xf32>
      %c0_12 = arith.constant 0 : index
      %c0_13 = arith.constant 0 : index
      %15 = vector.load %arg5[%c0_12, %c0_13] : memref<1x128xf32, #tpu.memory_space<vmem>>, vector<1x128xf32>
      %16 = vector.broadcast %15 : vector<1x128xf32> to vector<16x128xf32>
      %17 = arith.addf %14, %16 : vector<16x128xf32>
      %c0_14 = arith.constant 0 : index
      %c0_15 = arith.constant 0 : index
      %18 = vector.load %arg6[%c0_14, %c0_15] : memref<16x128xf32, #tpu.memory_space<vmem>>, vector<16x128xf32>
      tpu.vector_store %arg6[%c0_14, %c0_15], %17 {strides = array<i32>} : memref<16x128xf32, #tpu.memory_space<vmem>>, vector<16x128xf32>,
    } else {
    }
    return
  }
  func.func @transform_0(%arg0: i32, %arg1: i32, %arg2: i32) -> (i32, i32) {
    %c0_i32 = arith.constant 0 : i32
    return %arg0, %arg2 : i32, i32
  }
  func.func @transform_1(%arg0: i32, %arg1: i32, %arg2: i32) -> (i32, i32) {
    %c0_i32 = arith.constant 0 : i32
    return %arg2, %arg1 : i32, i32
  }
  func.func @transform_2(%arg0: i32, %arg1: i32, %arg2: i32) -> (i32, i32) {
    %c0_i32 = arith.constant 0 : i32
    %c0_i32_0 = arith.constant 0 : i32
    return %c0_i32, %arg1 : i32, i32
  }
  func.func @transform_3(%arg0: i32, %arg1: i32, %arg2: i32) -> (i32, i32) {
    %c0_i32 = arith.constant 0 : i32
    return %arg0, %arg1 : i32, i32
  }
}

</mosaic_0001>

<llo_original>
// kernel: tpu_custom_call.1
$region0: #{tpu_custom_call.1}
  #allocation0 [shape = 'u32[]', space=smem, size = 0x4, offset = 0x4, fixed_abs, tag = 'smem constant byte address 0x4 - core index']
  #allocation1 [shape = 'u32[144,128]{1,0:T(1,128)}', space=vmem, size = 0x12000, scoped, tag = 'internal scratch']
  #allocation2 [shape = 'f32[16,128]{1,0:T(8,128)}', space=vmem, size = 0x2000, scoped, tag = 'scratch operand']
  %s0 = inlined_call_operand.hbm [shape: f32[16,128], index: 0, kind: input, shape index: {}]
  %s1 = inlined_call_operand.hbm [shape: f32[128,128], index: 1, kind: input, shape index: {}]
  %s2 = inlined_call_operand.vmem [shape: f32[1,128], index: 2, kind: input, shape index: {}]
  %s3 = inlined_call_operand.hbm [shape: f32[16,128], index: 3, kind: output, shape index: {}]
  %s4 = sld [smem:[#allocation0]]
  $region38: #{tpu_custom_call.1} parent=0
    _
  %s6 = ssub.s32 1, %s4
  %s7 = scalar_select 0, %s6, %s4
  $region1: #{tpu_custom_call.1} parent=0
    #allocation3 [shape = 'u8[8192]{0}', space=vmem, size = 0x2000, scoped, tag = 'input window, operand 0, single buffered']
    #allocation4 [shape = 's32[1]{0}', space=sflag, size = 0x4, scoped, tag = 'scoped memory for tpu_custom_call.1']
    #allocation5 [shape = 's32[1]{0}', space=sflag, size = 0x4, scoped, tag = 'scoped memory for tpu_custom_call.1']
    #allocation6 [shape = 'u8[65536]{0}', space=vmem, size = 0x10000, scoped, tag = 'input window, operand 1, single buffered']
    #allocation7 [shape = 's32[1]{0}', space=sflag, size = 0x4, scoped, tag = 'scoped memory for tpu_custom_call.1']
    #allocation8 [shape = 'u8[8192]{0}', space=vmem, size = 0x2000, scoped, tag = 'output window, operand 0, single buffered']
    %8 = vsyncpa [#allocation4], 0
    %9 = vsyncpa [#allocation7], 0
    %10 = vsyncpa [#allocation5], 0
    // Predicated region
    $region2: #{tpu_custom_call.1} parent=1 // pred_check
      _
    $region3: #{tpu_custom_call.1} parent=1 // pred_check_branch
      %12 = sbr.rel (0) target = $region5
    $region4: #{tpu_custom_call.1} parent=1 // pred_region
      %s14 = ssub.s32 256, 256
      %15 = vsyncadd [#allocation4], %s14
      %s16 = sshll.u32 [#allocation3], 4
      %s17 = int_to_ptr.vmem [resolvable:$true] %s16
      %22 = dma.hbm_to_vmem [thread:$0]  %s0, 256, %s17, [#allocation4], 128, 128, 8
    $region5: #{tpu_custom_call.1} parent=1 // pred_fallthru
      _
    // Predicated region
    $region6: #{tpu_custom_call.1} parent=1 // pred_check
      _
    $region7: #{tpu_custom_call.1} parent=1 // pred_check_branch
      %24 = sbr.rel (0) target = $region9
    $region8: #{tpu_custom_call.1} parent=1 // pred_region
      %s26 = ssub.s32 2048, 2048
      %27 = vsyncadd [#allocation7], %s26
      %s28 = sshll.u32 [#allocation6], 4
      %s29 = int_to_ptr.vmem [resolvable:$true] %s28
      %34 = dma.hbm_to_vmem [thread:$0]  %s1, 2048, %s29, [#allocation7], 128, 128, 8
    $region9: #{tpu_custom_call.1} parent=1 // pred_fallthru
      _
    // Predicated region
    $region10: #{tpu_custom_call.1} parent=1 // pred_check
      _
    $region11: #{tpu_custom_call.1} parent=1 // pred_check_branch
      %36 = sbr.rel (0) target = $region13
    $region12: #{tpu_custom_call.1} parent=1 // pred_region
      _
    $region13: #{tpu_custom_call.1} parent=1 // pred_fallthru
      _
    // Predicated region
    $region14: #{tpu_custom_call.1} parent=1 // pred_check
      _
    $region15: #{tpu_custom_call.1} parent=1 // pred_check_branch
      %38 = sbr.rel (0) target = $region17
    $region16: #{tpu_custom_call.1} parent=1 // pred_region
      %39 = dma.done [#allocation4], 256
    $region17: #{tpu_custom_call.1} parent=1 // pred_fallthru
      _
    // Predicated region
    $region18: #{tpu_custom_call.1} parent=1 // pred_check
      _
    $region19: #{tpu_custom_call.1} parent=1 // pred_check_branch
      %41 = sbr.rel (0) target = $region21
    $region20: #{tpu_custom_call.1} parent=1 // pred_region
      %42 = dma.done [#allocation7], 2048
    $region21: #{tpu_custom_call.1} parent=1 // pred_fallthru
      _
    %p44 = scmp.eq.s32.totalorder 0, 0
    // Predicated region
    $region22: #{tpu_custom_call.1} parent=1 // pred_check
      %p45 = pneg %p44
    $region23: #{tpu_custom_call.1} parent=1 // pred_check_branch
      %47 = sbr.rel (%p45) target = $region25
    $region24: #{tpu_custom_call.1} parent=1 // pred_region
      %48 = vst [vmem:[#allocation2] sm:$0xff] 0.0
      %49 = vst [vmem:[#allocation2 + $0x8] sm:$0xff] 0.0
    $region25: #{tpu_custom_call.1} parent=1 // pred_fallthru
      _
    %v50 = vld [vmem:[#allocation2] sm:$0xff]
    %v51 = vld [vmem:[#allocation2 + $0x8] sm:$0xff]
    %v52 = vld [vmem:[#allocation3] sm:$0xff]
    %v53 = vld [vmem:[#allocation3 + $0x8] sm:$0xff]
    %v54 = vpack.c.bf16 %v53, %v52
    %v55 = vld [vmem:[#allocation6] sm:$0xff]
    %v56 = vld [vmem:[#allocation6 + $0x8] sm:$0xff]
    %v57 = vld [vmem:[#allocation6 + $0x10] sm:$0xff]
    %v58 = vld [vmem:[#allocation6 + $0x18] sm:$0xff]
    %v59 = vld [vmem:[#allocation6 + $0x20] sm:$0xff]
    %v60 = vld [vmem:[#allocation6 + $0x28] sm:$0xff]
    %v61 = vld [vmem:[#allocation6 + $0x30] sm:$0xff]
    %v62 = vld [vmem:[#allocation6 + $0x38] sm:$0xff]
    %v63 = vld [vmem:[#allocation6 + $0x40] sm:$0xff]
    %v64 = vld [vmem:[#allocation6 + $0x48] sm:$0xff]
    %v65 = vld [vmem:[#allocation6 + $0x50] sm:$0xff]
    %v66 = vld [vmem:[#allocation6 + $0x58] sm:$0xff]
    %v67 = vld [vmem:[#allocation6 + $0x60] sm:$0xff]
    %v68 = vld [vmem:[#allocation6 + $0x68] sm:$0xff]
    %v69 = vld [vmem:[#allocation6 + $0x70] sm:$0xff]
    %v70 = vld [vmem:[#allocation6 + $0x78] sm:$0xff]
    %v71 = vpack.c.bf16 %v56, %v55
    %v72 = vpack.c.bf16 %v58, %v57
    %v73 = vpack.c.bf16 %v60, %v59
    %v74 = vpack.c.bf16 %v62, %v61
    %v75 = vpack.c.bf16 %v64, %v63
    %v76 = vpack.c.bf16 %v66, %v65
    %v77 = vpack.c.bf16 %v68, %v67
    %v78 = vpack.c.bf16 %v70, %v69
    %79 = vmatprep.subr.bf16.mxu0 0
    %80 = vmatpush1.bf16.msra.mxu0 %v71
    %81 = vmatprep.subr.bf16.mxu0 0
    %82 = vmatpush1.bf16.msra.mxu0 %v72
    %83 = vmatprep.subr.bf16.mxu0 0
    %84 = vmatpush1.bf16.msra.mxu0 %v73
    %85 = vmatprep.subr.bf16.mxu0 0
    %86 = vmatpush1.bf16.msra.mxu0 %v74
    %87 = vmatprep.subr.bf16.mxu0 0
    %88 = vmatpush1.bf16.msra.mxu0 %v75
    %89 = vmatprep.subr.bf16.mxu0 0
    %90 = vmatpush1.bf16.msra.mxu0 %v76
    %91 = vmatprep.subr.bf16.mxu0 0
    %92 = vmatpush1.bf16.msra.mxu0 %v77
    %93 = vmatprep.subr.bf16.mxu0 0
    %94 = vmatpush1.bf16.msra.mxu0 %v78
    %95 = vmatprep.subr.bf16.mxu0 0
    %96 = vmatpush1.bf16.msra.mxu0 0
    %97 = vmatprep.subr.bf16.mxu0 0
    %98 = vmatpush1.bf16.msra.mxu0 0
    %99 = vmatprep.subr.bf16.mxu0 0
    %100 = vmatpush1.bf16.msra.mxu0 0
    %101 = vmatprep.subr.bf16.mxu0 0
    %102 = vmatpush1.bf16.msra.mxu0 0
    %103 = vmatprep.subr.bf16.mxu0 0
    %104 = vmatpush1.bf16.msra.mxu0 0
    %105 = vmatprep.subr.bf16.mxu0 0
    %106 = vmatpush1.bf16.msra.mxu0 0
    %107 = vmatprep.subr.bf16.mxu0 0
    %108 = vmatpush1.bf16.msra.mxu0 0
    %109 = vmatprep.subr.bf16.mxu0 0
    %110 = vmatpush1.bf16.msra.mxu0 0
    %111 = vmatprep.mubr.bf16.mxu0 0
    %112 = vmatmul.mubr.bf16.gmra.mrb[0].mxu0 %v54
    %v113 = vpop.f32.mrb[0].mxu0
    %v114 = vadd.f32 0.0, %v113
    %v115 = vpop.f32.mrb[0].mxu0
    %v116 = vpop.f32.mrb[0].mxu0
    %v117 = vadd.f32 0.0, %v116
    %v118 = vpop.f32.mrb[0].mxu0
    %119 = vdwg.mxu0
    %v120 = vadd.f32 %v50, %v114
    %v121 = vadd.f32 %v51, %v117
    %122 = vst [vmem:[#allocation2] sm:$0xff] %v120
    %123 = vst [vmem:[#allocation2 + $0x8] sm:$0xff] %v121
    // Predicated region
    $region26: #{tpu_custom_call.1} parent=1 // pred_check
      %p124 = pneg %p44
    $region27: #{tpu_custom_call.1} parent=1 // pred_check_branch
      %126 = sbr.rel (%p124) target = $region29
    $region28: #{tpu_custom_call.1} parent=1 // pred_region
      %v127 = vld [vmem:[#allocation2] sm:$0xff]
      %v128 = vld [vmem:[#allocation2 + $0x8] sm:$0xff]
      %v129 = vld [vmem:[%s2] sm:$0x1]
      %v131 = vlaneseq
      %v132 = vshrl.u32 %v131, 7
      %v133 = vsub.s32 0, %v132
      %v134 = vrot.slane %v129, %v133
      %v136 = vadd.f32 %v127, %v134
      %v137 = vadd.f32 %v128, %v134
      %138 = vst [vmem:[#allocation8] sm:$0xff] %v136
      %139 = vst [vmem:[#allocation8 + $0x8] sm:$0xff] %v137
    $region29: #{tpu_custom_call.1} parent=1 // pred_fallthru
      _
    // Predicated region
    $region30: #{tpu_custom_call.1} parent=1 // pred_check
      _
    $region31: #{tpu_custom_call.1} parent=1 // pred_check_branch
      %141 = sbr.rel (0) target = $region33
    $region32: #{tpu_custom_call.1} parent=1 // pred_region
      %s143 = ssub.s32 256, 256
      %144 = vsyncadd [#allocation5], %s143
      %s145 = sshll.u32 [#allocation8], 4
      %s146 = int_to_ptr.vmem [resolvable:$true] %s145
      %151 = dma.vmem_to_hbm [thread:$0]  %s146, 256, %s3, [#allocation5], 128, 128, 8
    $region33: #{tpu_custom_call.1} parent=1 // pred_fallthru
      _
    // Predicated region
    $region34: #{tpu_custom_call.1} parent=1 // pred_check
      _
    $region35: #{tpu_custom_call.1} parent=1 // pred_check_branch
      %153 = sbr.rel (0) target = $region37
    $region36: #{tpu_custom_call.1} parent=1 // pred_region
      %154 = dma.done [#allocation5], 256
    $region37: #{tpu_custom_call.1} parent=1 // pred_fallthru
      _
    %155 = vsyncpa [#allocation4], 1
    %156 = vsyncpa [#allocation7], 1
    %157 = vsyncpa [#allocation5], 1

</llo_original>
